<compile_context>
chip_gen: v7x
topology: tpu7x:2x2x1
jax: 0.10.0
libtpu: 0.0.40
codegen_flags: <defaults>
</compile_context>

<pallas_src>
import functools

import numpy as np

import jax
import jax.numpy as jnp
from jax.experimental import pallas as pl
from jax.experimental.pallas import tpu as pltpu

_EPS = 1e-6  # torch.nn.PairwiseDistance default eps (added to the difference)


def _laplacian_loss_kernel(rmask_ref, cmask_ref, segmat_ref, x_ref, y_ref, out_ref):
    """One (RB, L) block = whole packed images stacked along the sublane axis.

    rmask_ref : (RB, 2) f32, col 0 zero where h == 0, col 1 zero where h == H-1
    cmask_ref : (2, L)  f32, row 0 zero where w%W == 0, row 1 zero where w%W == W-1
    segmat_ref: (L, k)  f32 0/1 matrix mapping lanes -> packed image index
    """
    # Laplacian conv is linear -> lap(x) - lap(y) == lap(x - y): one stencil.
    d0 = x_ref[...].astype(jnp.float32) - y_ref[...].astype(jnp.float32)
    rb, lw = d0.shape

    # Fused 5-point zero-padded stencil (running accumulator, multiplicative
    # masks).  Rolls are circular; wrapped rows/columns land exactly on the
    # positions the masks zero out, so zero padding is reproduced.
    acc = 4.0 * d0 + _EPS  # PairwiseDistance adds eps to the difference
    acc = acc - rmask_ref[:, 0:1] * pltpu.roll(d0, shift=1, axis=0)        # up
    acc = acc - rmask_ref[:, 1:2] * pltpu.roll(d0, shift=rb - 1, axis=0)   # down
    acc = acc - cmask_ref[0:1, :] * pltpu.roll(d0, shift=1, axis=1)        # left
    acc = acc - cmask_ref[1:2, :] * pltpu.roll(d0, shift=lw - 1, axis=1)   # right

    # Segmented per-(image, row) sum of d^2 along the lane axis on the MXU
    # (idle otherwise); HIGHEST precision keeps the f32 accumulation exact.
    seg = jnp.dot(acc * acc, segmat_ref[...],
                  precision=jax.lax.Precision.HIGHEST,
                  preferred_element_type=jnp.float32)                      # (RB, k)

    # PairwiseDistance(p=2) per row, partial sum for this block.
    partial = jnp.sum(jnp.sqrt(seg))

    # Lane-dense per-block partial; the mean is finished in the JAX wrapper.
    out_ref[...] = jnp.full(out_ref.shape, partial, dtype=out_ref.dtype)


def _vmem_policy():
    """(vmem_limit_bytes, per-input block byte target), generation aware."""
    vmem_capacity = None
    try:
        if hasattr(pltpu, "get_tpu_info"):
            vmem_capacity = getattr(pltpu.get_tpu_info(), "vmem_capacity_bytes", None)
    except Exception:  # non-TPU / interpret environments
        vmem_capacity = None
    if vmem_capacity is None:
        vmem_capacity = 64 * 1024 * 1024  # assume the smallest (v7x-sized) VMEM
    if vmem_capacity >= 96 * 1024 * 1024:
        # v5e / v6e: 128 MiB physical VMEM -> big blocks amortize the ~0.35 us
        # per-grid-step overhead.
        return 96 * 1024 * 1024, 4 << 20
    # v7x: 64 MiB per TensorCore -> modest blocks, leave pipeline headroom.
    return 48 * 1024 * 1024, 2 << 20


def _pick_lane_pack(nc, w):
    """# of whole images packed side by side along the lane axis (k*W <= 128)."""
    if w >= 128:
        return 1
    kmax = min(128 // w, nc)
    best = 1
    for k in range(1, kmax + 1):
        if nc % k == 0:
            best = k
    return best


def _pick_superimages_per_block(m, h, l, itemsize, target_bytes):
    """Pick B = packed images per block (rows per block = B*H)."""
    total_rows = m * h
    img_bytes = h * l * itemsize

    def aligned(b):
        return (b * h) % 8 == 0 or b * h == total_rows

    divisors = [b for b in range(1, m + 1) if m % b == 0 and aligned(b)]
    if not divisors:
        divisors = [m]  # whole-array block is always a legal BlockSpec
    fits = [b for b in divisors if b * img_bytes <= target_bytes]
    # Prefer a grid of >= 2 steps so the single "parallel" axis can shard
    # across v7x's two TensorCores (harmless on v5e/v6e).
    fits_multi = [b for b in fits if m // b >= 2]
    if fits_multi:
        return max(fits_multi)
    if fits:
        return max(fits)
    # Even a single image blows the budget: take the smallest aligned block.
    # TODO(synk): tile H with a 1-row halo (or split W on a 2nd grid axis) so
    # huge single images pipeline instead of landing in one oversized block.
    return min(divisors)


@functools.partial(jax.jit, static_argnames=("lambda_laplacian",))
def laplacian_loss(inputs, targets, lambda_laplacian):
    """Pallas-TPU LaplacianLoss.forward; inputs/targets are (N, C, H, W).

    bf16 inputs are supported: blocks are sized by the input itemsize and the
    kernel upcasts to f32 after the load (halves HBM traffic for bf16 callers).
    """
    N, C, H, W = inputs.shape
    NC = N * C

    vmem_limit, target_bytes = _vmem_policy()
    itemsize = jnp.dtype(inputs.dtype).itemsize

    # Lane packing: k whole images side by side along the lane axis.
    k = _pick_lane_pack(NC, W)
    M = NC // k          # packed "super-images"
    L = k * W            # lane extent of the packed layout

    def pack(z):
        return z.reshape(M, k, H, W).transpose(0, 2, 1, 3).reshape(M * H, L)

    x2 = pack(inputs)
    y2 = pack(targets)

    B = _pick_superimages_per_block(M, H, L, itemsize, target_bytes)
    G = M // B           # grid size
    RB = B * H           # rows per block

    # Boundary / segment masks: tiny, VMEM-resident (constant index_map), so
    # each stencil neighbour is one roll + one broadcast multiply.
    hh = np.arange(RB) % H
    rmask = np.stack([hh != 0, hh != H - 1], axis=1).astype(np.float32)      # (RB, 2)
    ww = np.arange(L) % W
    cmask = np.stack([ww != 0, ww != W - 1], axis=0).astype(np.float32)      # (2, L)
    segmat = (np.arange(L)[:, None] // W
              == np.arange(k)[None, :]).astype(np.float32)                   # (L, k)

    # TODO(synk): sweep pipeline_mode=pl.Buffered(3) on the two data in_specs
    # if a trace shows exposed DMA after the VPU-trimming changes.
    partials = pl.pallas_call(
        _laplacian_loss_kernel,
        out_shape=jax.ShapeDtypeStruct((G, 8, 128), jnp.float32),
        grid_spec=pltpu.PrefetchScalarGridSpec(
            num_scalar_prefetch=0,
            grid=(G,),
            in_specs=[
                pl.BlockSpec((RB, 2), lambda g: (0, 0)),   # row masks (resident)
                pl.BlockSpec((2, L), lambda g: (0, 0)),    # lane masks (resident)
                pl.BlockSpec((L, k), lambda g: (0, 0)),    # segment matrix (resident)
                pl.BlockSpec((RB, L), lambda g: (g, 0)),   # inputs block
                pl.BlockSpec((RB, L), lambda g: (g, 0)),   # targets block
            ],
            out_specs=pl.BlockSpec((1, 8, 128), lambda g: (g, 0, 0)),
        ),
        compiler_params=pltpu.CompilerParams(
            dimension_semantics=("parallel",),
            vmem_limit_bytes=vmem_limit,
        ),
    )(jnp.asarray(rmask), jnp.asarray(cmask), jnp.asarray(segmat), x2, y2)

    # torch.mean over the (N, C, H) distance tensor, then lambda scaling (glue).
    total = jnp.sum(partials[:, 0, 0])
    return (lambda_laplacian * total / (N * C * H)).astype(jnp.float32)


def _reference_loss(inputs, targets, lambda_laplacian):
    """Pure-JAX reference matching the PyTorch module semantics."""
    def lap(z):
        zp = jnp.pad(z, ((0, 0), (0, 0), (1, 1), (1, 1)))
        return (4.0 * z
                - zp[:, :, :-2, 1:-1] - zp[:, :, 2:, 1:-1]
                - zp[:, :, 1:-1, :-2] - zp[:, :, 1:-1, 2:])
    d = lap(inputs) - lap(targets) + _EPS
    dist = jnp.sqrt(jnp.sum(d * d, axis=-1))   # L2 along last dim (W)
    return lambda_laplacian * jnp.mean(dist)


if __name__ == "__main__":
    key = jax.random.PRNGKey(0)
    k1, k2 = jax.random.split(key)

    N, C, H, W = 2, 3, 16, 16   # C == 3: the module's grouped conv expects 3 channels
    lambda_laplacian = 0.5

    inputs = jax.random.normal(k1, (N, C, H, W), dtype=jnp.float32)
    targets = jax.random.normal(k2, (N, C, H, W), dtype=jnp.float32)

    loss = jax.block_until_ready(laplacian_loss(inputs, targets, lambda_laplacian))
    ref = jax.block_until_ready(_reference_loss(inputs, targets, lambda_laplacian))
    assert jnp.allclose(loss, ref, rtol=1e-5, atol=1e-5), (loss, ref)

    print("KERNEL_OK")
</pallas_src>

<mosaic_0001>
module attributes {stable_mosaic.version = 11 : i64} {
  func.func @_laplacian_loss_kernel(%arg0: i32, %arg1: memref<16x2xf32, #tpu.memory_space<vmem>>, %arg2: memref<2x96xf32, #tpu.memory_space<vmem>>, %arg3: memref<96x6xf32, #tpu.memory_space<vmem>>, %arg4: memref<16x96xf32, #tpu.memory_space<vmem>>, %arg5: memref<16x96xf32, #tpu.memory_space<vmem>>, %arg6: memref<1x8x128xf32, #tpu.memory_space<vmem>>) attributes {dimension_semantics = [#tpu.dimension_semantics<parallel>], iteration_bounds = array<i64: 1>, scalar_prefetch = 0 : i64, scratch_operands = 0 : i64, tpu.core_type = #tpu.core_type<tc>, window_params = [{pipeline_mode = #tpu.pipeline_mode<synchronous>, transform_indices = @transform_0, window_bounds = array<i64: 16, 2>}, {pipeline_mode = #tpu.pipeline_mode<synchronous>, transform_indices = @transform_1, window_bounds = array<i64: 2, 96>}, {pipeline_mode = #tpu.pipeline_mode<synchronous>, transform_indices = @transform_2, window_bounds = array<i64: 96, 6>}, {transform_indices = @transform_3, window_bounds = array<i64: 16, 96>}, {transform_indices = @transform_4, window_bounds = array<i64: 16, 96>}, {transform_indices = @transform_5, window_bounds = array<i64: 1, 8, 128>}]} {
    %c0 = arith.constant 0 : index
    %c0_0 = arith.constant 0 : index
    %0 = vector.load %arg4[%c0, %c0_0] : memref<16x96xf32, #tpu.memory_space<vmem>>, vector<16x96xf32>
    %c0_1 = arith.constant 0 : index
    %c0_2 = arith.constant 0 : index
    %1 = vector.load %arg5[%c0_1, %c0_2] : memref<16x96xf32, #tpu.memory_space<vmem>>, vector<16x96xf32>
    %2 = arith.subf %0, %1 : vector<16x96xf32>
    %cst = arith.constant 4.000000e+00 : f32
    %3 = vector.broadcast %cst : f32 to vector<16x96xf32>
    %4 = arith.mulf %3, %2 : vector<16x96xf32>
    %cst_3 = arith.constant 9.99999997E-7 : f32
    %5 = vector.broadcast %cst_3 : f32 to vector<16x96xf32>
    %6 = arith.addf %4, %5 : vector<16x96xf32>
    %c0_4 = arith.constant 0 : index
    %c0_5 = arith.constant 0 : index
    %7 = vector.load %arg1[%c0_4, %c0_5] : memref<16x2xf32, #tpu.memory_space<vmem>>, vector<16x1xf32>
    %c1_i32 = arith.constant 1 : i32
    %8 = tpu.dynamic_rotate %2 by %c1_i32 dim 0 : vector<16x96xf32>, i32 -> vector<16x96xf32>
    %9 = vector.broadcast %7 : vector<16x1xf32> to vector<16x96xf32>
    %10 = arith.mulf %9, %8 : vector<16x96xf32>
    %11 = arith.subf %6, %10 : vector<16x96xf32>
    %c0_6 = arith.constant 0 : index
    %c1 = arith.constant 1 : index
    %12 = vector.load %arg1[%c0_6, %c1] : memref<16x2xf32, #tpu.memory_space<vmem>>, vector<16x1xf32>
    %c15_i32 = arith.constant 15 : i32
    %13 = tpu.dynamic_rotate %2 by %c15_i32 dim 0 : vector<16x96xf32>, i32 -> vector<16x96xf32>
    %14 = vector.broadcast %12 : vector<16x1xf32> to vector<16x96xf32>
    %15 = arith.mulf %14, %13 : vector<16x96xf32>
    %16 = arith.subf %11, %15 : vector<16x96xf32>
    %c0_7 = arith.constant 0 : index
    %c0_8 = arith.constant 0 : index
    %17 = vector.load %arg2[%c0_7, %c0_8] : memref<2x96xf32, #tpu.memory_space<vmem>>, vector<1x96xf32>
    %c1_i32_9 = arith.constant 1 : i32
    %18 = tpu.dynamic_rotate %2 by %c1_i32_9 dim 1 : vector<16x96xf32>, i32 -> vector<16x96xf32>
    %19 = vector.broadcast %17 : vector<1x96xf32> to vector<16x96xf32>
    %20 = arith.mulf %19, %18 : vector<16x96xf32>
    %21 = arith.subf %16, %20 : vector<16x96xf32>
    %c1_10 = arith.constant 1 : index
    %c0_11 = arith.constant 0 : index
    %22 = vector.load %arg2[%c1_10, %c0_11] : memref<2x96xf32, #tpu.memory_space<vmem>>, vector<1x96xf32>
    %c95_i32 = arith.constant 95 : i32
    %23 = tpu.dynamic_rotate %2 by %c95_i32 dim 1 : vector<16x96xf32>, i32 -> vector<16x96xf32>
    %24 = vector.broadcast %22 : vector<1x96xf32> to vector<16x96xf32>
    %25 = arith.mulf %24, %23 : vector<16x96xf32>
    %26 = arith.subf %21, %25 : vector<16x96xf32>
    %27 = arith.mulf %26, %26 : vector<16x96xf32>
    %c0_12 = arith.constant 0 : index
    %c0_13 = arith.constant 0 : index
    %28 = vector.load %arg3[%c0_12, %c0_13] : memref<96x6xf32, #tpu.memory_space<vmem>>, vector<96x6xf32>
    %cst_14 = arith.constant dense<0.000000e+00> : vector<16x6xf32>
    %29 = tpu.matmul %27, %28, %cst_14 {dimension_numbers = #tpu.dot_dimension_numbers<[1], [0], [0], [1], [0, 0, 1, 1], [], []>, precision = #tpu.contract_precision<fp32>} : vector<16x96xf32>, vector<96x6xf32>, vector<16x6xf32> -> vector<16x6xf32>
    %30 = math.sqrt %29 : vector<16x6xf32>
    %31 = vector.shape_cast %30 : vector<16x6xf32> to vector<1x16x6xf32>
    %cst_15 = arith.constant dense<0.000000e+00> : vector<1xf32>
    %32 = vector.multi_reduction <add>, %31, %cst_15 [1, 2] : vector<1x16x6xf32> to vector<1xf32>
    %33 = vector.shape_cast %32 : vector<1xf32> to vector<1x1x1xf32>
    %34 = vector.extract %33[0, 0, 0] : f32 from vector<1x1x1xf32>
    %35 = vector.broadcast %34 : f32 to vector<1x8x128xf32>
    %c0_16 = arith.constant 0 : index
    %c0_17 = arith.constant 0 : index
    %c0_18 = arith.constant 0 : index
    %36 = vector.load %arg6[%c0_16, %c0_17, %c0_18] : memref<1x8x128xf32, #tpu.memory_space<vmem>>, vector<1x8x128xf32>
    tpu.vector_store %arg6[%c0_16, %c0_17, %c0_18], %35 {strides = array<i32>} : memref<1x8x128xf32, #tpu.memory_space<vmem>>, vector<1x8x128xf32>,
    return
  }
  func.func @transform_0(%arg0: i32) -> (i32, i32) {
    %c0_i32 = arith.constant 0 : i32
    %c0_i32_0 = arith.constant 0 : i32
    %c0_i32_1 = arith.constant 0 : i32
    return %c0_i32, %c0_i32_0 : i32, i32
  }
  func.func @transform_1(%arg0: i32) -> (i32, i32) {
    %c0_i32 = arith.constant 0 : i32
    %c0_i32_0 = arith.constant 0 : i32
    %c0_i32_1 = arith.constant 0 : i32
    return %c0_i32, %c0_i32_0 : i32, i32
  }
  func.func @transform_2(%arg0: i32) -> (i32, i32) {
    %c0_i32 = arith.constant 0 : i32
    %c0_i32_0 = arith.constant 0 : i32
    %c0_i32_1 = arith.constant 0 : i32
    return %c0_i32, %c0_i32_0 : i32, i32
  }
  func.func @transform_3(%arg0: i32) -> (i32, i32) {
    %c0_i32 = arith.constant 0 : i32
    %c0_i32_0 = arith.constant 0 : i32
    return %arg0, %c0_i32 : i32, i32
  }
  func.func @transform_4(%arg0: i32) -> (i32, i32) {
    %c0_i32 = arith.constant 0 : i32
    %c0_i32_0 = arith.constant 0 : i32
    return %arg0, %c0_i32 : i32, i32
  }
  func.func @transform_5(%arg0: i32) -> (i32, i32, i32) {
    %c0_i32 = arith.constant 0 : i32
    %c0_i32_0 = arith.constant 0 : i32
    %c0_i32_1 = arith.constant 0 : i32
    return %arg0, %c0_i32, %c0_i32_0 : i32, i32, i32
  }
}

</mosaic_0001>

<llo_original>
// kernel: laplacian_loss.1
$region0: #{laplacian_loss.1}
  #allocation0 [shape = 'u32[]', space=smem, size = 0x4, offset = 0x4, fixed_abs, tag = 'smem constant byte address 0x4 - core index']
  #allocation1 [shape = 'u32[144,128]{1,0:T(1,128)}', space=vmem, size = 0x12000, scoped, tag = 'internal scratch']
  %s0 = inlined_call_operand.vmem [shape: f32[16,2], index: 0, kind: input, shape index: {}]
  %s1 = inlined_call_operand.vmem [shape: f32[2,96], index: 1, kind: input, shape index: {}]
  %s2 = inlined_call_operand.vmem [shape: f32[96,6], index: 2, kind: input, shape index: {}]
  %s3 = inlined_call_operand.vmem [shape: f32[16,96], index: 3, kind: input, shape index: {}]
  %s4 = inlined_call_operand.vmem [shape: f32[16,96], index: 4, kind: input, shape index: {}]
  %s5 = inlined_call_operand.vmem [shape: f32[1,8,128], index: 5, kind: output, shape index: {}]
  %s6 = sld [smem:[#allocation0]]
  $region30: #{laplacian_loss.1} parent=0
    _
  %s8 = ssub.s32 1, %s6
  %s9 = scalar_select 0, %s8, %s6
  // Predicated region
  $region2: #{laplacian_loss.1} parent=0 // pred_check
    _
  $region3: #{laplacian_loss.1} parent=0 // pred_check_branch
    %11 = sbr.rel (0) target = $region5
  $region4: #{laplacian_loss.1} parent=0 // pred_region
    _
  $region5: #{laplacian_loss.1} parent=0 // pred_fallthru
    _
  // Predicated region
  $region6: #{laplacian_loss.1} parent=0 // pred_check
    _
  $region7: #{laplacian_loss.1} parent=0 // pred_check_branch
    %13 = sbr.rel (0) target = $region9
  $region8: #{laplacian_loss.1} parent=0 // pred_region
    _
  $region9: #{laplacian_loss.1} parent=0 // pred_fallthru
    _
  // Predicated region
  $region10: #{laplacian_loss.1} parent=0 // pred_check
    _
  $region11: #{laplacian_loss.1} parent=0 // pred_check_branch
    %15 = sbr.rel (0) target = $region13
  $region12: #{laplacian_loss.1} parent=0 // pred_region
    _
  $region13: #{laplacian_loss.1} parent=0 // pred_fallthru
    _
  // Predicated region
  $region14: #{laplacian_loss.1} parent=0 // pred_check
    _
  $region15: #{laplacian_loss.1} parent=0 // pred_check_branch
    %17 = sbr.rel (0) target = $region17
  $region16: #{laplacian_loss.1} parent=0 // pred_region
    _
  $region17: #{laplacian_loss.1} parent=0 // pred_fallthru
    _
  // Predicated region
  $region18: #{laplacian_loss.1} parent=0 // pred_check
    _
  $region19: #{laplacian_loss.1} parent=0 // pred_check_branch
    %19 = sbr.rel (0) target = $region21
  $region20: #{laplacian_loss.1} parent=0 // pred_region
    _
  $region21: #{laplacian_loss.1} parent=0 // pred_fallthru
    _
  %v20 = vld [vmem:[%s3] sm:$0xff]
  %v21 = vld [vmem:[%s3 + $0x8] sm:$0xff]
  %v22 = vld [vmem:[%s4] sm:$0xff]
  %v23 = vld [vmem:[%s4 + $0x8] sm:$0xff]
  %v24 = vsub.f32 %v20, %v22
  %v25 = vsub.f32 %v21, %v23
  %v26 = vmul.f32 %v24, 4.0
  %v27 = vmul.f32 %v25, 4.0
  %v28 = vadd.f32 %v26, 1e-06
  %v29 = vadd.f32 %v27, 1e-06
  %v30 = vld [vmem:[%s0] sm:$0xff]
  %v31 = vld [vmem:[%s0 + $0x8] sm:$0xff]
  %v32 = vrot.slane %v24, 7
  %v33 = vrot.slane %v25, 7
  %v34 = vlaneseq
  %v35 = vshrl.u32 %v34, 7
  %vm36 = vcmp.lt.s32.totalorder %v35, 1
  %v37 = vsel %vm36, %v32, %v33
  %v38 = vsel %vm36, %v33, %v32
  %40 = vset.pattern.permute.xlu0 0
  %41 = vperm.xlu0 %40, %v30
  %v42 = vpop.permute.xlu0 %41
  %45 = vset.pattern.permute.xlu0 0
  %46 = vperm.xlu0 %45, %v31
  %v47 = vpop.permute.xlu0 %46
  %v49 = vmul.f32 %v42, %v38
  %v50 = vmul.f32 %v47, %v37
  %v51 = vsub.f32 %v28, %v49
  %v52 = vsub.f32 %v29, %v50
  %v53 = vrot.slane %v24, 1
  %v54 = vrot.slane %v25, 1
  %vm55 = vcmp.lt.s32.totalorder %v35, 7
  %v56 = vsel %vm55, %v53, %v54
  %v57 = vsel %vm55, %v54, %v53
  %58 = vset.pattern.permute.xlu0 1
  %59 = vperm.xlu0 %58, %v30
  %v60 = vpop.permute.xlu0 %59
  %62 = vset.pattern.permute.xlu0 1
  %63 = vperm.xlu0 %62, %v31
  %v64 = vpop.permute.xlu0 %63
  %v66 = vmul.f32 %v60, %v56
  %v67 = vmul.f32 %v64, %v57
  %v68 = vsub.f32 %v51, %v66
  %v69 = vsub.f32 %v52, %v67
  %v70 = vld [vmem:[%s1] sm:$0x1]
  %vm71 = vcmask 1048320
  %72 = vrot.lane.b32.xlu0 %v24, 96
  %v73 = vpop.permute.xlu0 %72
  %v74 = vsel %vm71, %v73, %v24
  %75 = vrot.lane.b32.xlu0 %v25, 96
  %v76 = vpop.permute.xlu0 %75
  %v77 = vsel %vm71, %v76, %v25
  %78 = vrot.lane.b32.xlu0 %v74, 96
  %v79 = vpop.permute.xlu0 %78
  %80 = vrot.lane.b32.xlu0 %v77, 96
  %v81 = vpop.permute.xlu0 %80
  %v82 = vsel %vm71, %v79, %v24
  %v83 = vsel %vm71, %v81, %v25
  %v84 = vlaneseq
  %v85 = vshrl.u32 %v84, 7
  %v86 = vsub.s32 0, %v85
  %v87 = vrot.slane %v70, %v86
  %92 = vrot.lane.b32.xlu0 %v82, 33
  %v93 = vpop.permute.xlu0 %92
  %94 = vrot.lane.b32.xlu0 %v79, 33
  %v95 = vpop.permute.xlu0 %94
  %96 = vrot.lane.b32.xlu0 %v83, 33
  %v97 = vpop.permute.xlu0 %96
  %98 = vrot.lane.b32.xlu0 %v81, 33
  %v99 = vpop.permute.xlu0 %98
  %vm100 = vcmask 269312
  %v101 = vsel %vm100, %v93, %v95
  %v102 = vsel %vm100, %v97, %v99
  %v105 = vmul.f32 %v87, %v101
  %v106 = vmul.f32 %v87, %v102
  %v107 = vsub.f32 %v68, %v105
  %v108 = vsub.f32 %v69, %v106
  %v109 = vld [vmem:[%s1 + $0x1] sm:$0x1]
  %v110 = vlaneseq
  %v111 = vshrl.u32 %v110, 7
  %v112 = vsub.s32 0, %v111
  %v113 = vrot.slane %v109, %v112
  %114 = vrot.lane.b32.xlu0 %v82, 127
  %v115 = vpop.permute.xlu0 %114
  %116 = vrot.lane.b32.xlu0 %v83, 127
  %v117 = vpop.permute.xlu0 %116
  %v120 = vmul.f32 %v113, %v115
  %v121 = vmul.f32 %v113, %v117
  %v122 = vsub.f32 %v107, %v120
  %v123 = vsub.f32 %v108, %v121
  %v124 = vmul.f32 %v122, %v122
  %v125 = vmul.f32 %v123, %v123
  %v126 = vld [vmem:[%s2] sm:$0xff]
  %v127 = vld [vmem:[%s2 + $0x8] sm:$0xff]
  %v128 = vld [vmem:[%s2 + $0x10] sm:$0xff]
  %v129 = vld [vmem:[%s2 + $0x18] sm:$0xff]
  %v130 = vld [vmem:[%s2 + $0x20] sm:$0xff]
  %v131 = vld [vmem:[%s2 + $0x28] sm:$0xff]
  %v132 = vld [vmem:[%s2 + $0x30] sm:$0xff]
  %v133 = vld [vmem:[%s2 + $0x38] sm:$0xff]
  %v134 = vld [vmem:[%s2 + $0x40] sm:$0xff]
  %v135 = vld [vmem:[%s2 + $0x48] sm:$0xff]
  %v136 = vld [vmem:[%s2 + $0x50] sm:$0xff]
  %v137 = vld [vmem:[%s2 + $0x58] sm:$0xff]
  %vm138 = vcmask 785408
  %v140 = vsel %vm138, %v124, 0
  %v143 = vsel %vm138, %v125, 0
  %145 = vmatprep.subr.mxu0 0.0
  %v146 = vand.u32 %v126, 4294901760
  %147 = vmatpush1.msra.mxu0 %v146
  %148 = vmatprep.subr.mxu0 0.0
  %v149 = vand.u32 %v127, 4294901760
  %150 = vmatpush1.msra.mxu0 %v149
  %151 = vmatprep.subr.mxu0 0.0
  %v152 = vand.u32 %v128, 4294901760
  %153 = vmatpush1.msra.mxu0 %v152
  %154 = vmatprep.subr.mxu0 0.0
  %v155 = vand.u32 %v129, 4294901760
  %156 = vmatpush1.msra.mxu0 %v155
  %157 = vmatprep.subr.mxu0 0.0
  %v158 = vand.u32 %v130, 4294901760
  %159 = vmatpush1.msra.mxu0 %v158
  %160 = vmatprep.subr.mxu0 0.0
  %v161 = vand.u32 %v131, 4294901760
  %162 = vmatpush1.msra.mxu0 %v161
  %163 = vmatprep.subr.mxu0 0.0
  %v164 = vand.u32 %v132, 4294901760
  %165 = vmatpush1.msra.mxu0 %v164
  %166 = vmatprep.subr.mxu0 0.0
  %v167 = vand.u32 %v133, 4294901760
  %168 = vmatpush1.msra.mxu0 %v167
  %169 = vmatprep.subr.mxu0 0.0
  %v170 = vand.u32 %v134, 4294901760
  %171 = vmatpush1.msra.mxu0 %v170
  %172 = vmatprep.subr.mxu0 0.0
  %v173 = vand.u32 %v135, 4294901760
  %174 = vmatpush1.msra.mxu0 %v173
  %175 = vmatprep.subr.mxu0 0.0
  %v176 = vand.u32 %v136, 4294901760
  %177 = vmatpush1.msra.mxu0 %v176
  %178 = vmatprep.subr.mxu0 0.0
  %v179 = vand.u32 %v137, 4294901760
  %180 = vmatpush1.msra.mxu0 %v179
  %181 = vmatprep.subr.mxu0 0.0
  %182 = vmatpush1.msra.mxu0 0.0
  %183 = vmatprep.subr.mxu0 0.0
  %184 = vmatpush1.msra.mxu0 0.0
  %185 = vmatprep.subr.mxu0 0.0
  %186 = vmatpush1.msra.mxu0 0.0
  %187 = vmatprep.subr.mxu0 0.0
  %188 = vmatpush1.msra.mxu0 0.0
  %189 = vmatprep.subr.mxu0 0.0
  %190 = vmatpush1.msra.mxu0 0.0
  %191 = vmatprep.subr.mxu0 0.0
  %192 = vmatpush1.msra.mxu0 0.0
  %193 = vmatprep.subr.mxu0 0.0
  %194 = vmatpush1.msra.mxu0 0.0
  %195 = vmatprep.subr.mxu0 0.0
  %196 = vmatpush1.msra.mxu0 0.0
  %197 = vmatprep.subr.mxu0 0.0
  %198 = vmatpush1.msra.mxu0 0.0
  %199 = vmatprep.subr.mxu0 0.0
  %200 = vmatpush1.msra.mxu0 0.0
  %201 = vmatprep.subr.mxu0 0.0
  %202 = vmatpush1.msra.mxu0 0.0
  %203 = vmatprep.subr.mxu0 0.0
  %204 = vmatpush1.msra.mxu0 0.0
  %205 = vmatprep.subr.mxu0 0.0
  %206 = vmatpush1.msra.mxu0 0.0
  %207 = vmatprep.subr.mxu0 0.0
  %208 = vmatpush1.msra.mxu0 0.0
  %209 = vmatprep.subr.mxu0 0.0
  %210 = vmatpush1.msra.mxu0 0.0
  %211 = vmatprep.subr.mxu0 0.0
  %212 = vmatpush1.msra.mxu0 0.0
  %213 = vmatprep.subr.mxu0 0.0
  %214 = vmatpush1.msra.mxu0 0.0
  %215 = vmatprep.subr.mxu0 0.0
  %216 = vmatpush1.msra.mxu0 0.0
  %217 = vmatprep.subr.mxu0 0.0
  %218 = vmatpush1.msra.mxu0 0.0
  %219 = vmatprep.subr.mxu0 0.0
  %220 = vmatpush1.msra.mxu0 0.0
  %221 = vmatprep.mubr.f32.mxu0 0.0
  %v222 = vand.u32 %v140, 4294901760
  %v223 = vsub.f32 %v140, %v222
  %v224 = vand.u32 %v223, 4294901760
  %v225 = vsub.f32 %v223, %v224
  %v226 = vand.u32 %v225, 4294901760
  %227 = vmatmul.mubr.f32.gmra.mrb[0].mxu0 %v226
  %v228 = vpop.f32.mrb[0].mxu0
  %v229 = vadd.f32 0.0, %v228
  %v230 = vpop.f32.mrb[0].mxu0
  %231 = vmatprep.mubr.f32.mxu0 0.0
  %v232 = vand.u32 %v143, 4294901760
  %v233 = vsub.f32 %v143, %v232
  %v234 = vand.u32 %v233, 4294901760
  %v235 = vsub.f32 %v233, %v234
  %v236 = vand.u32 %v235, 4294901760
  %237 = vmatmul.mubr.f32.gmra.mrb[0].mxu0 %v236
  %v238 = vpop.f32.mrb[0].mxu0
  %v239 = vadd.f32 0.0, %v238
  %v240 = vpop.f32.mrb[0].mxu0
  %241 = vdwg.mxu0
  %242 = vmatprep.subr.mxu0 0.0
  %v243 = vand.u32 %v126, 4294901760
  %v244 = vsub.f32 %v126, %v243
  %v245 = vand.u32 %v244, 4294901760
  %v246 = vsub.f32 %v244, %v245
  %v247 = vand.u32 %v246, 4294901760
  %248 = vmatpush1.msra.mxu0 %v247
  %249 = vmatprep.subr.mxu0 0.0
  %v250 = vand.u32 %v127, 4294901760
  %v251 = vsub.f32 %v127, %v250
  %v252 = vand.u32 %v251, 4294901760
  %v253 = vsub.f32 %v251, %v252
  %v254 = vand.u32 %v253, 4294901760
  %255 = vmatpush1.msra.mxu0 %v254
  %256 = vmatprep.subr.mxu0 0.0
  %v257 = vand.u32 %v128, 4294901760
  %v258 = vsub.f32 %v128, %v257
  %v259 = vand.u32 %v258, 4294901760
  %v260 = vsub.f32 %v258, %v259
  %v261 = vand.u32 %v260, 4294901760
  %262 = vmatpush1.msra.mxu0 %v261
  %263 = vmatprep.subr.mxu0 0.0
  %v264 = vand.u32 %v129, 4294901760
  %v265 = vsub.f32 %v129, %v264
  %v266 = vand.u32 %v265, 4294901760
  %v267 = vsub.f32 %v265, %v266
  %v268 = vand.u32 %v267, 4294901760
  %269 = vmatpush1.msra.mxu0 %v268
  %270 = vmatprep.subr.mxu0 0.0
  %v271 = vand.u32 %v130, 4294901760
  %v272 = vsub.f32 %v130, %v271
  %v273 = vand.u32 %v272, 4294901760
  %v274 = vsub.f32 %v272, %v273
  %v275 = vand.u32 %v274, 4294901760
  %276 = vmatpush1.msra.mxu0 %v275
  %277 = vmatprep.subr.mxu0 0.0
  %v278 = vand.u32 %v131, 4294901760
  %v279 = vsub.f32 %v131, %v278
  %v280 = vand.u32 %v279, 4294901760
  %v281 = vsub.f32 %v279, %v280
  %v282 = vand.u32 %v281, 4294901760
  %283 = vmatpush1.msra.mxu0 %v282
  %284 = vmatprep.subr.mxu0 0.0
  %v285 = vand.u32 %v132, 4294901760
  %v286 = vsub.f32 %v132, %v285
  %v287 = vand.u32 %v286, 4294901760
  %v288 = vsub.f32 %v286, %v287
  %v289 = vand.u32 %v288, 4294901760
  %290 = vmatpush1.msra.mxu0 %v289
  %291 = vmatprep.subr.mxu0 0.0
  %v292 = vand.u32 %v133, 4294901760
  %v293 = vsub.f32 %v133, %v292
  %v294 = vand.u32 %v293, 4294901760
  %v295 = vsub.f32 %v293, %v294
  %v296 = vand.u32 %v295, 4294901760
  %297 = vmatpush1.msra.mxu0 %v296
  %298 = vmatprep.subr.mxu0 0.0
  %v299 = vand.u32 %v134, 4294901760
  %v300 = vsub.f32 %v134, %v299
  %v301 = vand.u32 %v300, 4294901760
  %v302 = vsub.f32 %v300, %v301
  %v303 = vand.u32 %v302, 4294901760
  %304 = vmatpush1.msra.mxu0 %v303
  %305 = vmatprep.subr.mxu0 0.0
  %v306 = vand.u32 %v135, 4294901760
  %v307 = vsub.f32 %v135, %v306
  %v308 = vand.u32 %v307, 4294901760
  %v309 = vsub.f32 %v307, %v308
  %v310 = vand.u32 %v309, 4294901760
  %311 = vmatpush1.msra.mxu0 %v310
  %312 = vmatprep.subr.mxu0 0.0
  %v313 = vand.u32 %v136, 4294901760
  %v314 = vsub.f32 %v136, %v313
  %v315 = vand.u32 %v314, 4294901760
  %v316 = vsub.f32 %v314, %v315
  %v317 = vand.u32 %v316, 4294901760
  %318 = vmatpush1.msra.mxu0 %v317
  %319 = vmatprep.subr.mxu0 0.0
  %v320 = vand.u32 %v137, 4294901760
  %v321 = vsub.f32 %v137, %v320
  %v322 = vand.u32 %v321, 4294901760
  %v323 = vsub.f32 %v321, %v322
  %v324 = vand.u32 %v323, 4294901760
  %325 = vmatpush1.msra.mxu0 %v324
  %326 = vmatprep.subr.mxu0 0.0
  %327 = vmatpush1.msra.mxu0 0.0
  %328 = vmatprep.subr.mxu0 0.0
  %329 = vmatpush1.msra.mxu0 0.0
  %330 = vmatprep.subr.mxu0 0.0
  %331 = vmatpush1.msra.mxu0 0.0
  %332 = vmatprep.subr.mxu0 0.0
  %333 = vmatpush1.msra.mxu0 0.0
  %334 = vmatprep.subr.mxu0 0.0
  %335 = vmatpush1.msra.mxu0 0.0
  %336 = vmatprep.subr.mxu0 0.0
  %337 = vmatpush1.msra.mxu0 0.0
  %338 = vmatprep.subr.mxu0 0.0
  %339 = vmatpush1.msra.mxu0 0.0
  %340 = vmatprep.subr.mxu0 0.0
  %341 = vmatpush1.msra.mxu0 0.0
  %342 = vmatprep.subr.mxu0 0.0
  %343 = vmatpush1.msra.mxu0 0.0
  %344 = vmatprep.subr.mxu0 0.0
  %345 = vmatpush1.msra.mxu0 0.0
  %346 = vmatprep.subr.mxu0 0.0
  %347 = vmatpush1.msra.mxu0 0.0
  %348 = vmatprep.subr.mxu0 0.0
  %349 = vmatpush1.msra.mxu0 0.0
  %350 = vmatprep.subr.mxu0 0.0
  %351 = vmatpush1.msra.mxu0 0.0
  %352 = vmatprep.subr.mxu0 0.0
  %353 = vmatpush1.msra.mxu0 0.0
  %354 = vmatprep.subr.mxu0 0.0
  %355 = vmatpush1.msra.mxu0 0.0
  %356 = vmatprep.subr.mxu0 0.0
  %357 = vmatpush1.msra.mxu0 0.0
  %358 = vmatprep.subr.mxu0 0.0
  %359 = vmatpush1.msra.mxu0 0.0
  %360 = vmatprep.subr.mxu0 0.0
  %361 = vmatpush1.msra.mxu0 0.0
  %362 = vmatprep.subr.mxu0 0.0
  %363 = vmatpush1.msra.mxu0 0.0
  %364 = vmatprep.subr.mxu0 0.0
  %365 = vmatpush1.msra.mxu0 0.0
  %366 = vmatprep.mubr.f32.mxu0 0.0
  %v367 = vand.u32 %v140, 4294901760
  %368 = vmatmul.mubr.f32.gmra.mrb[0].mxu0 %v367
  %v369 = vpop.f32.mrb[0].mxu0
  %v370 = vadd.f32 %v229, %v369
  %v371 = vpop.f32.mrb[0].mxu0
  %372 = vmatprep.mubr.f32.mxu0 0.0
  %v373 = vand.u32 %v143, 4294901760
  %374 = vmatmul.mubr.f32.gmra.mrb[0].mxu0 %v373
  %v375 = vpop.f32.mrb[0].mxu0
  %v376 = vadd.f32 %v239, %v375
  %v377 = vpop.f32.mrb[0].mxu0
  %378 = vdwg.mxu0
  %379 = vmatprep.subr.mxu0 0.0
  %v380 = vand.u32 %v126, 4294901760
  %v381 = vsub.f32 %v126, %v380
  %382 = vmatpush1.msra.mxu0 %v381
  %383 = vmatprep.subr.mxu0 0.0
  %v384 = vand.u32 %v127, 4294901760
  %v385 = vsub.f32 %v127, %v384
  %386 = vmatpush1.msra.mxu0 %v385
  %387 = vmatprep.subr.mxu0 0.0
  %v388 = vand.u32 %v128, 4294901760
  %v389 = vsub.f32 %v128, %v388
  %390 = vmatpush1.msra.mxu0 %v389
  %391 = vmatprep.subr.mxu0 0.0
  %v392 = vand.u32 %v129, 4294901760
  %v393 = vsub.f32 %v129, %v392
  %394 = vmatpush1.msra.mxu0 %v393
  %395 = vmatprep.subr.mxu0 0.0
  %v396 = vand.u32 %v130, 4294901760
  %v397 = vsub.f32 %v130, %v396
  %398 = vmatpush1.msra.mxu0 %v397
  %399 = vmatprep.subr.mxu0 0.0
  %v400 = vand.u32 %v131, 4294901760
  %v401 = vsub.f32 %v131, %v400
  %402 = vmatpush1.msra.mxu0 %v401
  %403 = vmatprep.subr.mxu0 0.0
  %v404 = vand.u32 %v132, 4294901760
  %v405 = vsub.f32 %v132, %v404
  %406 = vmatpush1.msra.mxu0 %v405
  %407 = vmatprep.subr.mxu0 0.0
  %v408 = vand.u32 %v133, 4294901760
  %v409 = vsub.f32 %v133, %v408
  %410 = vmatpush1.msra.mxu0 %v409
  %411 = vmatprep.subr.mxu0 0.0
  %v412 = vand.u32 %v134, 4294901760
  %v413 = vsub.f32 %v134, %v412
  %414 = vmatpush1.msra.mxu0 %v413
  %415 = vmatprep.subr.mxu0 0.0
  %v416 = vand.u32 %v135, 4294901760
  %v417 = vsub.f32 %v135, %v416
  %418 = vmatpush1.msra.mxu0 %v417
  %419 = vmatprep.subr.mxu0 0.0
  %v420 = vand.u32 %v136, 4294901760
  %v421 = vsub.f32 %v136, %v420
  %422 = vmatpush1.msra.mxu0 %v421
  %423 = vmatprep.subr.mxu0 0.0
  %v424 = vand.u32 %v137, 4294901760
  %v425 = vsub.f32 %v137, %v424
  %426 = vmatpush1.msra.mxu0 %v425
  %427 = vmatprep.subr.mxu0 0.0
  %428 = vmatpush1.msra.mxu0 0.0
  %429 = vmatprep.subr.mxu0 0.0
  %430 = vmatpush1.msra.mxu0 0.0
  %431 = vmatprep.subr.mxu0 0.0
  %432 = vmatpush1.msra.mxu0 0.0
  %433 = vmatprep.subr.mxu0 0.0
  %434 = vmatpush1.msra.mxu0 0.0
  %435 = vmatprep.subr.mxu0 0.0
  %436 = vmatpush1.msra.mxu0 0.0
  %437 = vmatprep.subr.mxu0 0.0
  %438 = vmatpush1.msra.mxu0 0.0
  %439 = vmatprep.subr.mxu0 0.0
  %440 = vmatpush1.msra.mxu0 0.0
  %441 = vmatprep.subr.mxu0 0.0
  %442 = vmatpush1.msra.mxu0 0.0
  %443 = vmatprep.subr.mxu0 0.0
  %444 = vmatpush1.msra.mxu0 0.0
  %445 = vmatprep.subr.mxu0 0.0
  %446 = vmatpush1.msra.mxu0 0.0
  %447 = vmatprep.subr.mxu0 0.0
  %448 = vmatpush1.msra.mxu0 0.0
  %449 = vmatprep.subr.mxu0 0.0
  %450 = vmatpush1.msra.mxu0 0.0
  %451 = vmatprep.subr.mxu0 0.0
  %452 = vmatpush1.msra.mxu0 0.0
  %453 = vmatprep.subr.mxu0 0.0
  %454 = vmatpush1.msra.mxu0 0.0
  %455 = vmatprep.subr.mxu0 0.0
  %456 = vmatpush1.msra.mxu0 0.0
  %457 = vmatprep.subr.mxu0 0.0
  %458 = vmatpush1.msra.mxu0 0.0
  %459 = vmatprep.subr.mxu0 0.0
  %460 = vmatpush1.msra.mxu0 0.0
  %461 = vmatprep.subr.mxu0 0.0
  %462 = vmatpush1.msra.mxu0 0.0
  %463 = vmatprep.subr.mxu0 0.0
  %464 = vmatpush1.msra.mxu0 0.0
  %465 = vmatprep.subr.mxu0 0.0
  %466 = vmatpush1.msra.mxu0 0.0
  %467 = vmatprep.mubr.f32.mxu0 0.0
  %v468 = vand.u32 %v140, 4294901760
  %v469 = vsub.f32 %v140, %v468
  %470 = vmatmul.mubr.f32.gmra.mrb[0].mxu0 %v469
  %v471 = vpop.f32.mrb[0].mxu0
  %v472 = vadd.f32 %v370, %v471
  %v473 = vpop.f32.mrb[0].mxu0
  %474 = vmatprep.mubr.f32.mxu0 0.0
  %v475 = vand.u32 %v143, 4294901760
  %v476 = vsub.f32 %v143, %v475
  %477 = vmatmul.mubr.f32.gmra.mrb[0].mxu0 %v476
  %v478 = vpop.f32.mrb[0].mxu0
  %v479 = vadd.f32 %v376, %v478
  %v480 = vpop.f32.mrb[0].mxu0
  %481 = vdwg.mxu0
  %482 = vmatprep.subr.mxu0 0.0
  %v483 = vand.u32 %v126, 4294901760
  %484 = vmatpush1.msra.mxu0 %v483
  %485 = vmatprep.subr.mxu0 0.0
  %v486 = vand.u32 %v127, 4294901760
  %487 = vmatpush1.msra.mxu0 %v486
  %488 = vmatprep.subr.mxu0 0.0
  %v489 = vand.u32 %v128, 4294901760
  %490 = vmatpush1.msra.mxu0 %v489
  %491 = vmatprep.subr.mxu0 0.0
  %v492 = vand.u32 %v129, 4294901760
  %493 = vmatpush1.msra.mxu0 %v492
  %494 = vmatprep.subr.mxu0 0.0
  %v495 = vand.u32 %v130, 4294901760
  %496 = vmatpush1.msra.mxu0 %v495
  %497 = vmatprep.subr.mxu0 0.0
  %v498 = vand.u32 %v131, 4294901760
  %499 = vmatpush1.msra.mxu0 %v498
  %500 = vmatprep.subr.mxu0 0.0
  %v501 = vand.u32 %v132, 4294901760
  %502 = vmatpush1.msra.mxu0 %v501
  %503 = vmatprep.subr.mxu0 0.0
  %v504 = vand.u32 %v133, 4294901760
  %505 = vmatpush1.msra.mxu0 %v504
  %506 = vmatprep.subr.mxu0 0.0
  %v507 = vand.u32 %v134, 4294901760
  %508 = vmatpush1.msra.mxu0 %v507
  %509 = vmatprep.subr.mxu0 0.0
  %v510 = vand.u32 %v135, 4294901760
  %511 = vmatpush1.msra.mxu0 %v510
  %512 = vmatprep.subr.mxu0 0.0
  %v513 = vand.u32 %v136, 4294901760
  %514 = vmatpush1.msra.mxu0 %v513
  %515 = vmatprep.subr.mxu0 0.0
  %v516 = vand.u32 %v137, 4294901760
  %517 = vmatpush1.msra.mxu0 %v516
  %518 = vmatprep.subr.mxu0 0.0
  %519 = vmatpush1.msra.mxu0 0.0
  %520 = vmatprep.subr.mxu0 0.0
  %521 = vmatpush1.msra.mxu0 0.0
  %522 = vmatprep.subr.mxu0 0.0
  %523 = vmatpush1.msra.mxu0 0.0
  %524 = vmatprep.subr.mxu0 0.0
  %525 = vmatpush1.msra.mxu0 0.0
  %526 = vmatprep.subr.mxu0 0.0
  %527 = vmatpush1.msra.mxu0 0.0
  %528 = vmatprep.subr.mxu0 0.0
  %529 = vmatpush1.msra.mxu0 0.0
  %530 = vmatprep.subr.mxu0 0.0
  %531 = vmatpush1.msra.mxu0 0.0
  %532 = vmatprep.subr.mxu0 0.0
  %533 = vmatpush1.msra.mxu0 0.0
  %534 = vmatprep.subr.mxu0 0.0
  %535 = vmatpush1.msra.mxu0 0.0
  %536 = vmatprep.subr.mxu0 0.0
  %537 = vmatpush1.msra.mxu0 0.0
  %538 = vmatprep.subr.mxu0 0.0
  %539 = vmatpush1.msra.mxu0 0.0
  %540 = vmatprep.subr.mxu0 0.0
  %541 = vmatpush1.msra.mxu0 0.0
  %542 = vmatprep.subr.mxu0 0.0
  %543 = vmatpush1.msra.mxu0 0.0
  %544 = vmatprep.subr.mxu0 0.0
  %545 = vmatpush1.msra.mxu0 0.0
  %546 = vmatprep.subr.mxu0 0.0
  %547 = vmatpush1.msra.mxu0 0.0
  %548 = vmatprep.subr.mxu0 0.0
  %549 = vmatpush1.msra.mxu0 0.0
  %550 = vmatprep.subr.mxu0 0.0
  %551 = vmatpush1.msra.mxu0 0.0
  %552 = vmatprep.subr.mxu0 0.0
  %553 = vmatpush1.msra.mxu0 0.0
  %554 = vmatprep.subr.mxu0 0.0
  %555 = vmatpush1.msra.mxu0 0.0
  %556 = vmatprep.subr.mxu0 0.0
  %557 = vmatpush1.msra.mxu0 0.0
  %558 = vmatprep.mubr.f32.mxu0 0.0
  %v559 = vand.u32 %v140, 4294901760
  %v560 = vsub.f32 %v140, %v559
  %v561 = vand.u32 %v560, 4294901760
  %562 = vmatmul.mubr.f32.gmra.mrb[0].mxu0 %v561
  %v563 = vpop.f32.mrb[0].mxu0
  %v564 = vadd.f32 %v472, %v563
  %v565 = vpop.f32.mrb[0].mxu0
  %566 = vmatprep.mubr.f32.mxu0 0.0
  %v567 = vand.u32 %v143, 4294901760
  %v568 = vsub.f32 %v143, %v567
  %v569 = vand.u32 %v568, 4294901760
  %570 = vmatmul.mubr.f32.gmra.mrb[0].mxu0 %v569
  %v571 = vpop.f32.mrb[0].mxu0
  %v572 = vadd.f32 %v479, %v571
  %v573 = vpop.f32.mrb[0].mxu0
  %574 = vdwg.mxu0
  %575 = vmatprep.subr.mxu0 0.0
  %v576 = vand.u32 %v126, 4294901760
  %v577 = vsub.f32 %v126, %v576
  %v578 = vand.u32 %v577, 4294901760
  %579 = vmatpush1.msra.mxu0 %v578
  %580 = vmatprep.subr.mxu0 0.0
  %v581 = vand.u32 %v127, 4294901760
  %v582 = vsub.f32 %v127, %v581
  %v583 = vand.u32 %v582, 4294901760
  %584 = vmatpush1.msra.mxu0 %v583
  %585 = vmatprep.subr.mxu0 0.0
  %v586 = vand.u32 %v128, 4294901760
  %v587 = vsub.f32 %v128, %v586
  %v588 = vand.u32 %v587, 4294901760
  %589 = vmatpush1.msra.mxu0 %v588
  %590 = vmatprep.subr.mxu0 0.0
  %v591 = vand.u32 %v129, 4294901760
  %v592 = vsub.f32 %v129, %v591
  %v593 = vand.u32 %v592, 4294901760
  %594 = vmatpush1.msra.mxu0 %v593
  %595 = vmatprep.subr.mxu0 0.0
  %v596 = vand.u32 %v130, 4294901760
  %v597 = vsub.f32 %v130, %v596
  %v598 = vand.u32 %v597, 4294901760
  %599 = vmatpush1.msra.mxu0 %v598
  %600 = vmatprep.subr.mxu0 0.0
  %v601 = vand.u32 %v131, 4294901760
  %v602 = vsub.f32 %v131, %v601
  %v603 = vand.u32 %v602, 4294901760
  %604 = vmatpush1.msra.mxu0 %v603
  %605 = vmatprep.subr.mxu0 0.0
  %v606 = vand.u32 %v132, 4294901760
  %v607 = vsub.f32 %v132, %v606
  %v608 = vand.u32 %v607, 4294901760
  %609 = vmatpush1.msra.mxu0 %v608
  %610 = vmatprep.subr.mxu0 0.0
  %v611 = vand.u32 %v133, 4294901760
  %v612 = vsub.f32 %v133, %v611
  %v613 = vand.u32 %v612, 4294901760
  %614 = vmatpush1.msra.mxu0 %v613
  %615 = vmatprep.subr.mxu0 0.0
  %v616 = vand.u32 %v134, 4294901760
  %v617 = vsub.f32 %v134, %v616
  %v618 = vand.u32 %v617, 4294901760
  %619 = vmatpush1.msra.mxu0 %v618
  %620 = vmatprep.subr.mxu0 0.0
  %v621 = vand.u32 %v135, 4294901760
  %v622 = vsub.f32 %v135, %v621
  %v623 = vand.u32 %v622, 4294901760
  %624 = vmatpush1.msra.mxu0 %v623
  %625 = vmatprep.subr.mxu0 0.0
  %v626 = vand.u32 %v136, 4294901760
  %v627 = vsub.f32 %v136, %v626
  %v628 = vand.u32 %v627, 4294901760
  %629 = vmatpush1.msra.mxu0 %v628
  %630 = vmatprep.subr.mxu0 0.0
  %v631 = vand.u32 %v137, 4294901760
  %v632 = vsub.f32 %v137, %v631
  %v633 = vand.u32 %v632, 4294901760
  %634 = vmatpush1.msra.mxu0 %v633
  %635 = vmatprep.subr.mxu0 0.0
  %636 = vmatpush1.msra.mxu0 0.0
  %637 = vmatprep.subr.mxu0 0.0
  %638 = vmatpush1.msra.mxu0 0.0
  %639 = vmatprep.subr.mxu0 0.0
  %640 = vmatpush1.msra.mxu0 0.0
  %641 = vmatprep.subr.mxu0 0.0
  %642 = vmatpush1.msra.mxu0 0.0
  %643 = vmatprep.subr.mxu0 0.0
  %644 = vmatpush1.msra.mxu0 0.0
  %645 = vmatprep.subr.mxu0 0.0
  %646 = vmatpush1.msra.mxu0 0.0
  %647 = vmatprep.subr.mxu0 0.0
  %648 = vmatpush1.msra.mxu0 0.0
  %649 = vmatprep.subr.mxu0 0.0
  %650 = vmatpush1.msra.mxu0 0.0
  %651 = vmatprep.subr.mxu0 0.0
  %652 = vmatpush1.msra.mxu0 0.0
  %653 = vmatprep.subr.mxu0 0.0
  %654 = vmatpush1.msra.mxu0 0.0
  %655 = vmatprep.subr.mxu0 0.0
  %656 = vmatpush1.msra.mxu0 0.0
  %657 = vmatprep.subr.mxu0 0.0
  %658 = vmatpush1.msra.mxu0 0.0
  %659 = vmatprep.subr.mxu0 0.0
  %660 = vmatpush1.msra.mxu0 0.0
  %661 = vmatprep.subr.mxu0 0.0
  %662 = vmatpush1.msra.mxu0 0.0
  %663 = vmatprep.subr.mxu0 0.0
  %664 = vmatpush1.msra.mxu0 0.0
  %665 = vmatprep.subr.mxu0 0.0
  %666 = vmatpush1.msra.mxu0 0.0
  %667 = vmatprep.subr.mxu0 0.0
  %668 = vmatpush1.msra.mxu0 0.0
  %669 = vmatprep.subr.mxu0 0.0
  %670 = vmatpush1.msra.mxu0 0.0
  %671 = vmatprep.subr.mxu0 0.0
  %672 = vmatpush1.msra.mxu0 0.0
  %673 = vmatprep.subr.mxu0 0.0
  %674 = vmatpush1.msra.mxu0 0.0
  %675 = vmatprep.mubr.f32.mxu0 0.0
  %v676 = vand.u32 %v140, 4294901760
  %677 = vmatmul.mubr.f32.gmra.mrb[0].mxu0 %v676
  %v678 = vpop.f32.mrb[0].mxu0
  %v679 = vadd.f32 %v564, %v678
  %v680 = vpop.f32.mrb[0].mxu0
  %681 = vmatprep.mubr.f32.mxu0 0.0
  %v682 = vand.u32 %v143, 4294901760
  %683 = vmatmul.mubr.f32.gmra.mrb[0].mxu0 %v682
  %v684 = vpop.f32.mrb[0].mxu0
  %v685 = vadd.f32 %v572, %v684
  %v686 = vpop.f32.mrb[0].mxu0
  %687 = vdwg.mxu0
  %688 = vmatprep.subr.mxu0 0.0
  %v689 = vand.u32 %v126, 4294901760
  %690 = vmatpush1.msra.mxu0 %v689
  %691 = vmatprep.subr.mxu0 0.0
  %v692 = vand.u32 %v127, 4294901760
  %693 = vmatpush1.msra.mxu0 %v692
  %694 = vmatprep.subr.mxu0 0.0
  %v695 = vand.u32 %v128, 4294901760
  %696 = vmatpush1.msra.mxu0 %v695
  %697 = vmatprep.subr.mxu0 0.0
  %v698 = vand.u32 %v129, 4294901760
  %699 = vmatpush1.msra.mxu0 %v698
  %700 = vmatprep.subr.mxu0 0.0
  %v701 = vand.u32 %v130, 4294901760
  %702 = vmatpush1.msra.mxu0 %v701
  %703 = vmatprep.subr.mxu0 0.0
  %v704 = vand.u32 %v131, 4294901760
  %705 = vmatpush1.msra.mxu0 %v704
  %706 = vmatprep.subr.mxu0 0.0
  %v707 = vand.u32 %v132, 4294901760
  %708 = vmatpush1.msra.mxu0 %v707
  %709 = vmatprep.subr.mxu0 0.0
  %v710 = vand.u32 %v133, 4294901760
  %711 = vmatpush1.msra.mxu0 %v710
  %712 = vmatprep.subr.mxu0 0.0
  %v713 = vand.u32 %v134, 4294901760
  %714 = vmatpush1.msra.mxu0 %v713
  %715 = vmatprep.subr.mxu0 0.0
  %v716 = vand.u32 %v135, 4294901760
  %717 = vmatpush1.msra.mxu0 %v716
  %718 = vmatprep.subr.mxu0 0.0
  %v719 = vand.u32 %v136, 4294901760
  %720 = vmatpush1.msra.mxu0 %v719
  %721 = vmatprep.subr.mxu0 0.0
  %v722 = vand.u32 %v137, 4294901760
  %723 = vmatpush1.msra.mxu0 %v722
  %724 = vmatprep.subr.mxu0 0.0
  %725 = vmatpush1.msra.mxu0 0.0
  %726 = vmatprep.subr.mxu0 0.0
  %727 = vmatpush1.msra.mxu0 0.0
  %728 = vmatprep.subr.mxu0 0.0
  %729 = vmatpush1.msra.mxu0 0.0
  %730 = vmatprep.subr.mxu0 0.0
  %731 = vmatpush1.msra.mxu0 0.0
  %732 = vmatprep.subr.mxu0 0.0
  %733 = vmatpush1.msra.mxu0 0.0
  %734 = vmatprep.subr.mxu0 0.0
  %735 = vmatpush1.msra.mxu0 0.0
  %736 = vmatprep.subr.mxu0 0.0
  %737 = vmatpush1.msra.mxu0 0.0
  %738 = vmatprep.subr.mxu0 0.0
  %739 = vmatpush1.msra.mxu0 0.0
  %740 = vmatprep.subr.mxu0 0.0
  %741 = vmatpush1.msra.mxu0 0.0
  %742 = vmatprep.subr.mxu0 0.0
  %743 = vmatpush1.msra.mxu0 0.0
  %744 = vmatprep.subr.mxu0 0.0
  %745 = vmatpush1.msra.mxu0 0.0
  %746 = vmatprep.subr.mxu0 0.0
  %747 = vmatpush1.msra.mxu0 0.0
  %748 = vmatprep.subr.mxu0 0.0
  %749 = vmatpush1.msra.mxu0 0.0
  %750 = vmatprep.subr.mxu0 0.0
  %751 = vmatpush1.msra.mxu0 0.0
  %752 = vmatprep.subr.mxu0 0.0
  %753 = vmatpush1.msra.mxu0 0.0
  %754 = vmatprep.subr.mxu0 0.0
  %755 = vmatpush1.msra.mxu0 0.0
  %756 = vmatprep.subr.mxu0 0.0
  %757 = vmatpush1.msra.mxu0 0.0
  %758 = vmatprep.subr.mxu0 0.0
  %759 = vmatpush1.msra.mxu0 0.0
  %760 = vmatprep.subr.mxu0 0.0
  %761 = vmatpush1.msra.mxu0 0.0
  %762 = vmatprep.subr.mxu0 0.0
  %763 = vmatpush1.msra.mxu0 0.0
  %764 = vmatprep.mubr.f32.mxu0 0.0
  %v765 = vand.u32 %v140, 4294901760
  %766 = vmatmul.mubr.f32.gmra.mrb[0].mxu0 %v765
  %v767 = vpop.f32.mrb[0].mxu0
  %v768 = vadd.f32 %v679, %v767
  %v769 = vpop.f32.mrb[0].mxu0
  %770 = vmatprep.mubr.f32.mxu0 0.0
  %v771 = vand.u32 %v143, 4294901760
  %772 = vmatmul.mubr.f32.gmra.mrb[0].mxu0 %v771
  %v773 = vpop.f32.mrb[0].mxu0
  %v774 = vadd.f32 %v685, %v773
  %v775 = vpop.f32.mrb[0].mxu0
  %776 = vdwg.mxu0
  %v777 = vrsqrt.pop %v768
  %v778 = vmul.f32 %v768, %v777
  %vm779 = vcmp.eq.f32.partialorder %v768, inf
  %v780 = vsel %vm779, %v768, %v778
  %vm781 = vcmp.eq.f32.partialorder %v768, 0.0
  %v782 = vand.u32 %v768, 2147483648
  %v783 = vsel %vm781, %v782, %v780
  %v784 = vrsqrt.pop %v774
  %v785 = vmul.f32 %v774, %v784
  %vm786 = vcmp.eq.f32.partialorder %v774, inf
  %v787 = vsel %vm786, %v774, %v785
  %vm788 = vcmp.eq.f32.partialorder %v774, 0.0
  %v789 = vand.u32 %v774, 2147483648
  %v790 = vsel %vm788, %v789, %v787
  %vm791 = vcmask 48128
  %v792 = vsel %vm791, %v783, 0.0
  %v793 = vsel %vm791, %v790, 0.0
  %v794 = vadd.f32 %v792, %v793
  %795 = vadd.xlane.f32.xlu0 %v794
  %v796 = vpop.xlane.xlu0 %795
  %v797 = vrot.slane %v796, 4
  %v798 = vadd.f32 %v796, %v797
  %v799 = vrot.slane %v798, 2
  %v800 = vadd.f32 %v798, %v799
  %v801 = vrot.slane %v800, 1
  %v802 = vadd.f32 %v800, %v801
  %s803 = vtos %v802
  %v804 = vstv %s803
  %805 = vst [vmem:[%s5] sm:$0xff] %v804
  // Predicated region
  $region22: #{laplacian_loss.1} parent=0 // pred_check
    _
  $region23: #{laplacian_loss.1} parent=0 // pred_check_branch
    %807 = sbr.rel (0) target = $region25
  $region24: #{laplacian_loss.1} parent=0 // pred_region
    _
  $region25: #{laplacian_loss.1} parent=0 // pred_fallthru
    _
  // Predicated region
  $region26: #{laplacian_loss.1} parent=0 // pred_check
    _
  $region27: #{laplacian_loss.1} parent=0 // pred_check_branch
    %809 = sbr.rel (0) target = $region29
  $region28: #{laplacian_loss.1} parent=0 // pred_region
    _
  $region29: #{laplacian_loss.1} parent=0 // pred_fallthru
    _

</llo_original>
